<compile_context>
chip_gen: v7x
topology: tpu7x:2x2x1
jax: 0.10.0
libtpu: 0.0.40
codegen_flags: <defaults>
</compile_context>

<pallas_src>
import jax
import jax.numpy as jnp
from jax.experimental import pallas as pl
from jax.experimental.pallas import tpu as pltpu

IN_FEATURES = 32
OUT_FEATURES = 1


def _round_up(a, m):
    return (a + m - 1) // m * m


def counting_head_kernel(x_ref, w_ref, b_ref, o_ref):
    # x_ref: (tb, 32)  natural batch-major activations
    # w_ref: (1, 32)   PyTorch-layout weight row (resident across grid steps)
    # b_ref: (1,)      bias scalar in SMEM
    # o_ref: (tb, 1)   per-row output
    x = x_ref[...].astype(jnp.float32)
    w = w_ref[...].astype(jnp.float32)
    # 32-wide VPU multiply + XLU lane-reduce; both idle relative to the DMA.
    logits = jnp.sum(x * w, axis=-1, keepdims=True) + b_ref[0]
    o_ref[...] = jnp.maximum(logits, 0.0).astype(o_ref.dtype)


def counting_head(x, weight, bias, *, tb=32768):
    """Forward pass of CountingHead: relu(x @ weight.T + bias).

    x: [B, 32]; weight: [1, 32] (PyTorch layout); bias: [1].
    Returns [B, 1] in x's dtype.
    """
    B = x.shape[0]
    out_dtype = x.dtype

    w = weight.reshape(OUT_FEATURES, IN_FEATURES)      # no transpose needed
    b = bias.astype(jnp.float32).reshape((1,))         # SMEM scalar

    # Batch tile: full array if it fits in one block, otherwise a
    # sublane-aligned (multiple of 8) tile; grid may be non-divisible.
    if B <= tb:
        tb_eff = B
    else:
        tb_eff = _round_up(min(tb, B), 8)
    grid = (pl.cdiv(B, tb_eff),)

    # Double-buffered VMEM footprint; raise the scoped limit only if needed.
    x_item = jnp.dtype(x.dtype).itemsize
    o_item = jnp.dtype(out_dtype).itemsize
    buf_bytes = 2 * tb_eff * (IN_FEATURES * x_item + OUT_FEATURES * o_item)
    compiler_kwargs = dict(dimension_semantics=("parallel",))
    if buf_bytes > 12 * 1024 * 1024:
        compiler_kwargs["vmem_limit_bytes"] = min(
            int(buf_bytes * 1.25) + (1 << 20), 56 * 1024 * 1024
        )

    cost = pl.CostEstimate(
        flops=2 * B * IN_FEATURES + B,
        transcendentals=0,
        bytes_accessed=B * IN_FEATURES * x_item
        + B * OUT_FEATURES * o_item
        + IN_FEATURES * OUT_FEATURES * 4
        + 4,
    )

    out = pl.pallas_call(
        counting_head_kernel,
        out_shape=jax.ShapeDtypeStruct((B, OUT_FEATURES), out_dtype),
        grid_spec=pltpu.PrefetchScalarGridSpec(
            num_scalar_prefetch=0,
            grid=grid,
            in_specs=[
                # Batch-tiled activations in their natural [B, 32] layout.
                pl.BlockSpec((tb_eff, IN_FEATURES), lambda i: (i, 0)),
                # Constant block -> weight stays resident across grid steps.
                pl.BlockSpec((OUT_FEATURES, IN_FEATURES), lambda i: (0, 0)),
                # Scalar bias in SMEM (no tiny padded VMEM stream for it).
                pl.BlockSpec(memory_space=pltpu.MemorySpace.SMEM),
            ],
            out_specs=pl.BlockSpec((tb_eff, OUT_FEATURES), lambda i: (i, 0)),
        ),
        compiler_params=pltpu.CompilerParams(**compiler_kwargs),
        cost_estimate=cost,
    )(x, w, b)

    return out


def init_params(key):
    """Shapes match nn.Linear(32, 1); xavier-uniform weight (initWeights),
    PyTorch-default uniform bias."""
    kw, kb = jax.random.split(key)
    bound_w = (6.0 / (IN_FEATURES + OUT_FEATURES)) ** 0.5
    weight = jax.random.uniform(
        kw, (OUT_FEATURES, IN_FEATURES), jnp.float32, -bound_w, bound_w
    )
    bound_b = 1.0 / (IN_FEATURES ** 0.5)
    bias = jax.random.uniform(kb, (OUT_FEATURES,), jnp.float32, -bound_b, bound_b)
    return weight, bias


if __name__ == "__main__":
    key = jax.random.PRNGKey(0)
    k_x, k_x2, k_p = jax.random.split(key, 3)

    weight, bias = init_params(k_p)

    # Small demo shape: single block (tb_eff == B == 2).
    batch = 2
    x = jax.random.normal(k_x, (batch, IN_FEATURES), dtype=jnp.float32)
    out = jax.block_until_ready(counting_head(x, weight, bias))
    ref = jnp.maximum(x @ weight.T + bias, 0.0)
    assert out.shape == (batch, OUT_FEATURES)
    assert jnp.allclose(out, ref, atol=1e-5, rtol=1e-5)

    # Multiple batch tiles + a ragged (non-divisible) edge block: grid of 3.
    batch2 = 257
    x2 = jax.random.normal(k_x2, (batch2, IN_FEATURES), dtype=jnp.float32)
    out2 = jax.block_until_ready(counting_head(x2, weight, bias, tb=128))
    ref2 = jnp.maximum(x2 @ weight.T + bias, 0.0)
    assert out2.shape == (batch2, OUT_FEATURES)
    assert jnp.allclose(out2, ref2, atol=1e-5, rtol=1e-5)

    # bf16 activations stream half the bytes; upcast happens in-kernel.
    x3 = x2.astype(jnp.bfloat16)
    out3 = jax.block_until_ready(counting_head(x3, weight, bias, tb=128))
    ref3 = jnp.maximum(
        x3.astype(jnp.float32) @ weight.T + bias, 0.0
    ).astype(jnp.bfloat16)
    assert out3.dtype == jnp.bfloat16
    assert jnp.allclose(
        out3.astype(jnp.float32), ref3.astype(jnp.float32), atol=2e-2, rtol=2e-2
    )

    print("KERNEL_OK")
</pallas_src>

<mosaic_0001>
module attributes {stable_mosaic.version = 11 : i64} {
  func.func @counting_head_kernel(%arg0: i32, %arg1: memref<2x32xf32, #tpu.memory_space<vmem>>, %arg2: memref<1x32xf32, #tpu.memory_space<vmem>>, %arg3: memref<1xf32, #tpu.memory_space<smem>>, %arg4: memref<2x1xf32, #tpu.memory_space<vmem>>) attributes {dimension_semantics = [#tpu.dimension_semantics<parallel>], iteration_bounds = array<i64: 1>, scalar_prefetch = 0 : i64, scratch_operands = 0 : i64, tpu.core_type = #tpu.core_type<tc>, window_params = [{transform_indices = @transform_0, window_bounds = array<i64: 2, 32>}, {pipeline_mode = #tpu.pipeline_mode<synchronous>, transform_indices = @transform_1, window_bounds = array<i64: 1, 32>}, {transform_indices = @transform_2, window_bounds = array<i64: 1>}, {transform_indices = @transform_3, window_bounds = array<i64: 2, 1>}]} {
    %c0 = arith.constant 0 : index
    %c0_0 = arith.constant 0 : index
    %0 = vector.load %arg1[%c0, %c0_0] : memref<2x32xf32, #tpu.memory_space<vmem>>, vector<2x32xf32>
    %c0_1 = arith.constant 0 : index
    %c0_2 = arith.constant 0 : index
    %1 = vector.load %arg2[%c0_1, %c0_2] : memref<1x32xf32, #tpu.memory_space<vmem>>, vector<1x32xf32>
    %2 = vector.broadcast %1 : vector<1x32xf32> to vector<2x32xf32>
    %3 = arith.mulf %0, %2 : vector<2x32xf32>
    %cst = arith.constant dense<0.000000e+00> : vector<2xf32>
    %4 = vector.multi_reduction <add>, %3, %cst [1] : vector<2x32xf32> to vector<2xf32>
    %5 = vector.shape_cast %4 : vector<2xf32> to vector<2x1xf32>
    %c0_3 = arith.constant 0 : index
    %6 = memref.load %arg3[%c0_3] : memref<1xf32, #tpu.memory_space<smem>>
    %7 = vector.broadcast %6 : f32 to vector<2x1xf32>
    %8 = arith.addf %5, %7 : vector<2x1xf32>
    %cst_4 = arith.constant 0.000000e+00 : f32
    %9 = vector.broadcast %cst_4 : f32 to vector<2x1xf32>
    %10 = arith.maximumf %8, %9 : vector<2x1xf32>
    %c0_5 = arith.constant 0 : index
    %c0_6 = arith.constant 0 : index
    %11 = vector.load %arg4[%c0_5, %c0_6] : memref<2x1xf32, #tpu.memory_space<vmem>>, vector<2x1xf32>
    tpu.vector_store %arg4[%c0_5, %c0_6], %10 {strides = array<i32>} : memref<2x1xf32, #tpu.memory_space<vmem>>, vector<2x1xf32>,
    return
  }
  func.func @transform_0(%arg0: i32) -> (i32, i32) {
    %c0_i32 = arith.constant 0 : i32
    %c0_i32_0 = arith.constant 0 : i32
    return %arg0, %c0_i32 : i32, i32
  }
  func.func @transform_1(%arg0: i32) -> (i32, i32) {
    %c0_i32 = arith.constant 0 : i32
    %c0_i32_0 = arith.constant 0 : i32
    %c0_i32_1 = arith.constant 0 : i32
    return %c0_i32, %c0_i32_0 : i32, i32
  }
  func.func @transform_2(%arg0: i32) -> i32 {
    %c0_i32 = arith.constant 0 : i32
    %c0_i32_0 = arith.constant 0 : i32
    return %c0_i32 : i32
  }
  func.func @transform_3(%arg0: i32) -> (i32, i32) {
    %c0_i32 = arith.constant 0 : i32
    %c0_i32_0 = arith.constant 0 : i32
    return %arg0, %c0_i32 : i32, i32
  }
}

</mosaic_0001>

<llo_original>
// kernel: tpu_custom_call.1
$region0: #{tpu_custom_call.1}
  #allocation0 [shape = 'u32[]', space=smem, size = 0x4, offset = 0x4, fixed_abs, tag = 'smem constant byte address 0x4 - core index']
  #allocation1 [shape = 'u32[144,128]{1,0:T(1,128)}', space=vmem, size = 0x12000, scoped, tag = 'internal scratch']
  #allocation2 [shape = 'f32[1]{0:T(128)S(6)}', space=smem, size = 0x200, scoped, tag = 'scoped memory for tpu_custom_call.1']
  %s0 = inlined_call_operand.vmem [shape: f32[2,32], index: 0, kind: input, shape index: {}]
  %s1 = inlined_call_operand.vmem [shape: f32[1,32], index: 1, kind: input, shape index: {}]
  %s2 = inlined_call_operand.<no memory space> [shape: f32[1], index: 2, kind: input, shape index: {}]
  %s3 = inlined_call_operand.vmem [shape: f32[2,1], index: 3, kind: output, shape index: {}]
  %s4 = sld [smem:[#allocation0]]
  $region22: #{tpu_custom_call.1} parent=0
    _
  %s6 = ssub.s32 1, %s4
  %s7 = scalar_select 0, %s6, %s4
  %8 = sst [smem:[#allocation2]] %s2
  // Predicated region
  $region2: #{tpu_custom_call.1} parent=0 // pred_check
    _
  $region3: #{tpu_custom_call.1} parent=0 // pred_check_branch
    %10 = sbr.rel (0) target = $region5
  $region4: #{tpu_custom_call.1} parent=0 // pred_region
    _
  $region5: #{tpu_custom_call.1} parent=0 // pred_fallthru
    _
  // Predicated region
  $region6: #{tpu_custom_call.1} parent=0 // pred_check
    _
  $region7: #{tpu_custom_call.1} parent=0 // pred_check_branch
    %12 = sbr.rel (0) target = $region9
  $region8: #{tpu_custom_call.1} parent=0 // pred_region
    _
  $region9: #{tpu_custom_call.1} parent=0 // pred_fallthru
    _
  // Predicated region
  $region10: #{tpu_custom_call.1} parent=0 // pred_check
    _
  $region11: #{tpu_custom_call.1} parent=0 // pred_check_branch
    %14 = sbr.rel (0) target = $region13
  $region12: #{tpu_custom_call.1} parent=0 // pred_region
    _
  $region13: #{tpu_custom_call.1} parent=0 // pred_fallthru
    _
  %v15 = vld [vmem:[%s0] sm:$0x3]
  %v16 = vld [vmem:[%s1] sm:$0x1]
  %v18 = vlaneseq
  %v19 = vshrl.u32 %v18, 7
  %v20 = vsub.s32 0, %v19
  %v21 = vrot.slane %v16, %v20
  %v23 = vmul.f32 %v15, %v21
  %vm24 = vcmask 254976
  %v25 = vsel %vm24, %v23, 0.0
  %26 = vadd.xlane.f32.xlu0 %v25
  %v27 = vpop.xlane.xlu0 %26
  %s28 = sld [smem:[#allocation2]]
  %v29 = vstv %s28
  %v30 = vadd.f32 %v27, %v29
  %v31 = vmax.f32 %v30, 0.0
  %vm32 = vcmask 1024
  %33 = vst.msk [vmem:[%s3] sm:$0x3] %vm32, %v31
  // Predicated region
  $region14: #{tpu_custom_call.1} parent=0 // pred_check
    _
  $region15: #{tpu_custom_call.1} parent=0 // pred_check_branch
    %35 = sbr.rel (0) target = $region17
  $region16: #{tpu_custom_call.1} parent=0 // pred_region
    _
  $region17: #{tpu_custom_call.1} parent=0 // pred_fallthru
    _
  // Predicated region
  $region18: #{tpu_custom_call.1} parent=0 // pred_check
    _
  $region19: #{tpu_custom_call.1} parent=0 // pred_check_branch
    %37 = sbr.rel (0) target = $region21
  $region20: #{tpu_custom_call.1} parent=0 // pred_region
    _
  $region21: #{tpu_custom_call.1} parent=0 // pred_fallthru
    _

</llo_original>
